<compile_context>
chip_gen: v7x
topology: tpu7x:2x2x1
jax: 0.10.0
libtpu: 0.0.40
codegen_flags: <defaults>
</compile_context>

<pallas_src>
import functools
import math

import jax
import jax.numpy as jnp
import numpy as np
from jax import lax
from jax.experimental import pallas as pl
from jax.experimental.pallas import tpu as pltpu


def _dsconv_kernel(x_ref, dwb_ref, pwb_ref, o_ref, xpad_ref, *, w, lane_pad):
    # x_ref   : (rows_in,  H*W)   rows_in = B_TILE*C   (bf16 or f32 in HBM)
    # dwb_ref : (rows_in,  10)    [3x3 depthwise weights (BN1 scale folded) | BN1 bias]
    # pwb_ref : (rows_out, rows_in+1) [block-diag pointwise (BN2 scale folded) | BN2 bias]
    # o_ref   : (rows_out, H*W)   rows_out = B_TILE*Cout
    # xpad_ref: (rows_in, 2*lane_pad + H*W) f32 VMEM scratch
    rows_in, hw = x_ref.shape
    rows_out = o_ref.shape[0]

    # Stage the input into the lane-padded scratch.  Only the (W+1)-wide halo
    # strips that the 9 taps actually read are zero-filled (~85% less staging
    # vst work than zeroing the full pads).  Main-body store is 128-aligned.
    zstrip = jnp.zeros((rows_in, w + 1), jnp.float32)
    xpad_ref[:, lane_pad - (w + 1):lane_pad] = zstrip
    xpad_ref[:, lane_pad + hw:lane_pad + hw + (w + 1)] = zstrip
    xpad_ref[:, lane_pad:lane_pad + hw] = x_ref[...].astype(jnp.float32)

    # Column masks: only the W wrap-around of the flattened spatial axis needs
    # masking; the row halo is covered by the zero strips.
    col = lax.broadcasted_iota(jnp.int32, (1, hw), 1) % w
    m_left = col >= 1            # dj = -1 taps invalid at j == 0
    m_right = col <= (w - 2)     # dj = +1 taps invalid at j == W-1

    dwb = dwb_ref[...]           # load merged depthwise params once
    dw = dwb[:, :9]
    b1 = dwb[:, 9:10]

    # Depthwise 3x3 (stride 1, pad 1): 9 statically-shifted lane slices,
    # grouped by dj so each wrap mask is applied once (2 selects total).
    acc_l = jnp.zeros((rows_in, hw), jnp.float32)
    acc_c = jnp.zeros((rows_in, hw), jnp.float32)
    acc_r = jnp.zeros((rows_in, hw), jnp.float32)
    for di in (-1, 0, 1):
        base = lane_pad + di * w
        k = (di + 1) * 3
        acc_l = acc_l + xpad_ref[:, base - 1:base - 1 + hw] * dw[:, k:k + 1]
        acc_c = acc_c + xpad_ref[:, base:base + hw] * dw[:, k + 1:k + 2]
        acc_r = acc_r + xpad_ref[:, base + 1:base + 1 + hw] * dw[:, k + 2:k + 3]
    acc = acc_c + jnp.where(m_left, acc_l, 0.0) + jnp.where(m_right, acc_r, 0.0)

    # BN1 bias (scale already folded into dw) + ReLU.
    y1 = jnp.maximum(acc + b1, 0.0)

    # Pointwise 1x1 conv over the packed images (block-diagonal weights).
    pwb = pwb_ref[...]
    pw = pwb[:, :rows_in]
    b2 = pwb[:, rows_in:rows_in + 1]
    if rows_in < 32:
        # Tiny contraction: VPU outer-product FMAs (a K=8 MXU dot is <1% used).
        # TODO(synk): per-generation crossover (lower to ~16 on v5e's 128-wide MXU).
        y2 = jnp.zeros((rows_out, hw), jnp.float32)
        for cc in range(rows_in):
            y2 = y2 + pw[:, cc:cc + 1] * y1[cc:cc + 1, :]
    else:
        y2 = jnp.dot(pw, y1, preferred_element_type=jnp.float32)

    # BN2 bias + ReLU, lane-dense store.
    o_ref[...] = jnp.maximum(y2 + b2, 0.0).astype(o_ref.dtype)


def dsconv_pallas(x_nchw, dw_w_oihw, pw_w_oihw,
                  gamma1, beta1, mean1, var1,
                  gamma2, beta2, mean2, var2,
                  eps=1e-5, io_dtype=jnp.bfloat16):
    """_DSConv forward (inference). x_nchw: (N, C, H, W) -> (N, Cout, H, W)."""
    n, c, h, w = x_nchw.shape
    cout = pw_w_oihw.shape[0]
    hw = h * w
    # Zero lane padding on the left of the flattened spatial axis; must be
    # >= W+1 to cover the row halo, rounded to 128 for an aligned body store.
    lane_pad = ((w + 1 + 127) // 128) * 128

    # Batch packing: choose B_TILE so B_TILE*C is a multiple of 8 (fills the
    # sublane axis of each vreg).  If that would exceed N, take the whole
    # batch in one grid step (full-dim block is always a legal BlockSpec).
    b_tile = 8 // math.gcd(c, 8)
    if b_tile >= n:
        b_tile = n
    n_pad = -(-n // b_tile) * b_tile
    if n_pad != n:
        # TODO(synk): rare HBM pad pass when N % B_TILE != 0; a spatial grid
        # axis would avoid it (and keep both v7x TensorCores busy for odd N).
        x_nchw = jnp.pad(x_nchw, ((0, n_pad - n), (0, 0), (0, 0), (0, 0)))
    rows_in = b_tile * c
    rows_out = b_tile * cout

    # Fold BatchNorm (running stats) into per-channel scale/bias, then fold
    # the scales straight into the conv weights.  Biases merged with weights.
    scale1 = gamma1 / jnp.sqrt(var1 + eps)
    bias1 = beta1 - mean1 * scale1
    scale2 = gamma2 / jnp.sqrt(var2 + eps)
    bias2 = beta2 - mean2 * scale2

    dw_k = dw_w_oihw.reshape(c, 9) * scale1[:, None]          # (C, 9)
    b1 = bias1.reshape(c, 1)                                   # (C, 1)
    pw_k = pw_w_oihw.reshape(cout, c) * scale2[:, None]        # (Cout, C)
    b2 = bias2.reshape(cout, 1)                                # (Cout, 1)

    # Merge + tile parameters for the packed-batch layout (2 DMAs instead of 4).
    dwb = jnp.tile(jnp.concatenate([dw_k, b1], axis=1), (b_tile, 1))      # (rows_in, 10)
    pw_bd = jnp.kron(jnp.eye(b_tile, dtype=jnp.float32), pw_k)            # (rows_out, rows_in)
    pwb = jnp.concatenate([pw_bd, jnp.tile(b2, (b_tile, 1))], axis=1)     # (rows_out, rows_in+1)

    # Free reshape NCHW -> (N*C, H*W); bf16 I/O halves DMA bytes (compute f32).
    x_flat = x_nchw.reshape(n_pad * c, hw).astype(io_dtype)

    itemsize = jnp.dtype(io_dtype).itemsize
    flops = n_pad * hw * (18 * c + 2 * c * cout + 2 * c + 2 * cout)
    bytes_accessed = itemsize * n_pad * hw * (c + cout) + 4 * (dwb.size + pwb.size)

    grid = (n_pad // b_tile,)
    full = lambda a: pl.BlockSpec(a.shape, lambda i: (0, 0))

    out_flat = pl.pallas_call(
        functools.partial(_dsconv_kernel, w=w, lane_pad=lane_pad),
        out_shape=jax.ShapeDtypeStruct((n_pad * cout, hw), io_dtype),
        grid_spec=pltpu.PrefetchScalarGridSpec(
            num_scalar_prefetch=0,
            grid=grid,
            in_specs=[
                pl.BlockSpec((rows_in, hw), lambda i: (i, 0)),
                full(dwb),
                full(pwb),
            ],
            out_specs=pl.BlockSpec((rows_out, hw), lambda i: (i, 0)),
            scratch_shapes=[pltpu.VMEM((rows_in, 2 * lane_pad + hw), jnp.float32)],
        ),
        compiler_params=pltpu.CompilerParams(
            dimension_semantics=("parallel",)),
        cost_estimate=pl.CostEstimate(
            flops=flops, transcendentals=0, bytes_accessed=bytes_accessed),
    )(x_flat, dwb, pwb)

    # Free reshape back to NCHW; drop any batch padding.
    return out_flat.reshape(n_pad, cout, h, w)[:n]


def dsconv_reference(x_nchw, dw_w_oihw, pw_w_oihw,
                     gamma1, beta1, mean1, var1,
                     gamma2, beta2, mean2, var2, eps=1e-5):
    """Plain-JAX reference (lax.conv) in NCHW, inference-mode BN folded."""
    c = x_nchw.shape[1]
    scale1 = gamma1 / jnp.sqrt(var1 + eps)
    bias1 = beta1 - mean1 * scale1
    scale2 = gamma2 / jnp.sqrt(var2 + eps)
    bias2 = beta2 - mean2 * scale2
    dn = ("NCHW", "OIHW", "NCHW")
    y = lax.conv_general_dilated(x_nchw, dw_w_oihw, (1, 1), "SAME",
                                 feature_group_count=c, dimension_numbers=dn)
    y = jnp.maximum(y * scale1.reshape(1, -1, 1, 1) + bias1.reshape(1, -1, 1, 1), 0.0)
    y = lax.conv_general_dilated(y, pw_w_oihw, (1, 1), "VALID", dimension_numbers=dn)
    y = jnp.maximum(y * scale2.reshape(1, -1, 1, 1) + bias2.reshape(1, -1, 1, 1), 0.0)
    return y


if __name__ == "__main__":
    N, C, H, W = 2, 4, 16, 16
    COUT = 8
    EPS = 1e-5

    key = jax.random.PRNGKey(0)
    ks = jax.random.split(key, 10)

    x = jax.random.normal(ks[0], (N, C, H, W), jnp.float32)

    dw_w_oihw = 0.3 * jax.random.normal(ks[1], (C, 1, 3, 3), jnp.float32)     # depthwise
    pw_w_oihw = 0.3 * jax.random.normal(ks[2], (COUT, C, 1, 1), jnp.float32)  # pointwise
    gamma1 = 1.0 + 0.1 * jax.random.normal(ks[3], (C,), jnp.float32)
    beta1 = 0.1 * jax.random.normal(ks[4], (C,), jnp.float32)
    mean1 = 0.1 * jax.random.normal(ks[5], (C,), jnp.float32)
    var1 = jnp.abs(jax.random.normal(ks[6], (C,), jnp.float32)) + 0.5
    gamma2 = 1.0 + 0.1 * jax.random.normal(ks[7], (COUT,), jnp.float32)
    beta2 = 0.1 * jax.random.normal(ks[8], (COUT,), jnp.float32)
    mean2 = 0.1 * jax.random.normal(ks[9], (COUT,), jnp.float32)
    var2 = jnp.ones((COUT,), jnp.float32)

    params = (dw_w_oihw, pw_w_oihw, gamma1, beta1, mean1, var1,
              gamma2, beta2, mean2, var2)

    # 1) f32 I/O path: tight check against the f32 reference.
    out32 = jax.jit(functools.partial(dsconv_pallas, io_dtype=jnp.float32))(x, *params)
    out32 = jax.block_until_ready(out32)
    ref32 = dsconv_reference(x, *params, eps=EPS)
    np.testing.assert_allclose(np.asarray(out32), np.asarray(ref32),
                               rtol=1e-4, atol=1e-4)

    # 2) bf16 I/O path (default, halves HBM traffic): compare against the
    #    reference computed on the bf16-quantized input; the only remaining
    #    discrepancy is the bf16 rounding of the stored output.
    x_bf16 = x.astype(jnp.bfloat16)
    out16 = jax.jit(dsconv_pallas)(x_bf16, *params)
    out16 = jax.block_until_ready(out16)
    ref16 = dsconv_reference(x_bf16.astype(jnp.float32), *params, eps=EPS)
    np.testing.assert_allclose(np.asarray(out16.astype(jnp.float32)),
                               np.asarray(ref16), rtol=2e-2, atol=2e-2)

    print("KERNEL_OK")
</pallas_src>

<mosaic_0001>
module attributes {stable_mosaic.version = 11 : i64} {
  func.func @_dsconv_kernel(%arg0: i32, %arg1: memref<8x256xf32, #tpu.memory_space<vmem>>, %arg2: memref<8x10xf32, #tpu.memory_space<vmem>>, %arg3: memref<16x9xf32, #tpu.memory_space<vmem>>, %arg4: memref<16x256xf32, #tpu.memory_space<vmem>>, %arg5: memref<8x512xf32, #tpu.memory_space<vmem>>) attributes {dimension_semantics = [#tpu.dimension_semantics<parallel>], iteration_bounds = array<i64: 1>, scalar_prefetch = 0 : i64, scratch_operands = 1 : i64, tpu.core_type = #tpu.core_type<tc>, window_params = [{transform_indices = @transform_0, window_bounds = array<i64: 8, 256>}, {pipeline_mode = #tpu.pipeline_mode<synchronous>, transform_indices = @transform_1, window_bounds = array<i64: 8, 10>}, {pipeline_mode = #tpu.pipeline_mode<synchronous>, transform_indices = @transform_2, window_bounds = array<i64: 16, 9>}, {transform_indices = @transform_3, window_bounds = array<i64: 16, 256>}]} {
    %cst = arith.constant 0.000000e+00 : f32
    %0 = vector.broadcast %cst : f32 to vector<8x17xf32>
    %c0 = arith.constant 0 : index
    %c111 = arith.constant 111 : index
    %1 = vector.load %arg5[%c0, %c111] : memref<8x512xf32, #tpu.memory_space<vmem>>, vector<8x17xf32>
    tpu.vector_store %arg5[%c0, %c111], %0 {strides = array<i32>} : memref<8x512xf32, #tpu.memory_space<vmem>>, vector<8x17xf32>,
    %c0_0 = arith.constant 0 : index
    %c384 = arith.constant 384 : index
    %2 = vector.load %arg5[%c0_0, %c384] : memref<8x512xf32, #tpu.memory_space<vmem>>, vector<8x17xf32>
    tpu.vector_store %arg5[%c0_0, %c384], %0 {strides = array<i32>} : memref<8x512xf32, #tpu.memory_space<vmem>>, vector<8x17xf32>,
    %c0_1 = arith.constant 0 : index
    %c0_2 = arith.constant 0 : index
    %3 = vector.load %arg1[%c0_1, %c0_2] : memref<8x256xf32, #tpu.memory_space<vmem>>, vector<8x256xf32>
    %c0_3 = arith.constant 0 : index
    %c128 = arith.constant 128 : index
    %4 = vector.load %arg5[%c0_3, %c128] : memref<8x512xf32, #tpu.memory_space<vmem>>, vector<8x256xf32>
    tpu.vector_store %arg5[%c0_3, %c128], %3 {strides = array<i32>} : memref<8x512xf32, #tpu.memory_space<vmem>>, vector<8x256xf32>,
    %5 = tpu.iota {dimensions = array<i32: 1>} : vector<1x256xi32>
    %c16_i32 = arith.constant 16 : i32
    %c0_i32 = arith.constant 0 : i32
    %6 = arith.cmpi eq, %c16_i32, %c0_i32 : i32
    %c1_i32 = arith.constant 1 : i32
    %7 = arith.select %6, %c1_i32, %c16_i32 : i32
    %8 = vector.broadcast %7 : i32 to vector<1x256xi32>
    %9 = arith.remsi %5, %8 : vector<1x256xi32>
    %c0_i32_4 = arith.constant 0 : i32
    %10 = vector.broadcast %c0_i32_4 : i32 to vector<1x256xi32>
    %11 = arith.cmpi ne, %9, %10 : vector<1x256xi32>
    %c0_i32_5 = arith.constant 0 : i32
    %12 = vector.broadcast %c0_i32_5 : i32 to vector<1x256xi32>
    %13 = arith.cmpi slt, %9, %12 : vector<1x256xi32>
    %c0_i32_6 = arith.constant 0 : i32
    %14 = arith.cmpi slt, %7, %c0_i32_6 : i32
    %15 = vector.broadcast %14 : i1 to vector<1x256xi1>
    %16 = vector.broadcast %15 : vector<1x256xi1> to vector<1x256xi1>
    %17 = arith.xori %13, %16 : vector<1x256xi1>
    %18 = arith.andi %17, %11 : vector<1x256xi1>
    %19 = vector.broadcast %7 : i32 to vector<1x256xi32>
    %20 = arith.addi %9, %19 : vector<1x256xi32>
    %21 = arith.select %18, %20, %9 : vector<1x256xi1>, vector<1x256xi32>
    %c1_i32_7 = arith.constant 1 : i32
    %22 = vector.broadcast %c1_i32_7 : i32 to vector<1x256xi32>
    %23 = arith.cmpi sge, %21, %22 : vector<1x256xi32>
    %c14_i32 = arith.constant 14 : i32
    %24 = vector.broadcast %c14_i32 : i32 to vector<1x256xi32>
    %25 = arith.cmpi sle, %21, %24 : vector<1x256xi32>
    %c0_8 = arith.constant 0 : index
    %c0_9 = arith.constant 0 : index
    %26 = vector.load %arg2[%c0_8, %c0_9] : memref<8x10xf32, #tpu.memory_space<vmem>>, vector<8x10xf32>
    %27 = vector.extract_strided_slice %26 {offsets = [0, 0], sizes = [8, 9], strides = [1, 1]} : vector<8x10xf32> to vector<8x9xf32>
    %28 = vector.extract_strided_slice %26 {offsets = [0, 9], sizes = [8, 1], strides = [1, 1]} : vector<8x10xf32> to vector<8x1xf32>
    %cst_10 = arith.constant 0.000000e+00 : f32
    %29 = vector.broadcast %cst_10 : f32 to vector<8x256xf32>
    %cst_11 = arith.constant 0.000000e+00 : f32
    %30 = vector.broadcast %cst_11 : f32 to vector<8x256xf32>
    %cst_12 = arith.constant 0.000000e+00 : f32
    %31 = vector.broadcast %cst_12 : f32 to vector<8x256xf32>
    %c0_13 = arith.constant 0 : index
    %c111_14 = arith.constant 111 : index
    %32 = vector.load %arg5[%c0_13, %c111_14] : memref<8x512xf32, #tpu.memory_space<vmem>>, vector<8x256xf32>
    %33 = vector.extract_strided_slice %27 {offsets = [0, 0], sizes = [8, 1], strides = [1, 1]} : vector<8x9xf32> to vector<8x1xf32>
    %34 = vector.broadcast %33 : vector<8x1xf32> to vector<8x256xf32>
    %35 = arith.mulf %32, %34 : vector<8x256xf32>
    %36 = arith.addf %29, %35 : vector<8x256xf32>
    %c0_15 = arith.constant 0 : index
    %c112 = arith.constant 112 : index
    %37 = vector.load %arg5[%c0_15, %c112] : memref<8x512xf32, #tpu.memory_space<vmem>>, vector<8x256xf32>
    %38 = vector.extract_strided_slice %27 {offsets = [0, 1], sizes = [8, 1], strides = [1, 1]} : vector<8x9xf32> to vector<8x1xf32>
    %39 = vector.broadcast %38 : vector<8x1xf32> to vector<8x256xf32>
    %40 = arith.mulf %37, %39 : vector<8x256xf32>
    %41 = arith.addf %30, %40 : vector<8x256xf32>
    %c0_16 = arith.constant 0 : index
    %c113 = arith.constant 113 : index
    %42 = vector.load %arg5[%c0_16, %c113] : memref<8x512xf32, #tpu.memory_space<vmem>>, vector<8x256xf32>
    %43 = vector.extract_strided_slice %27 {offsets = [0, 2], sizes = [8, 1], strides = [1, 1]} : vector<8x9xf32> to vector<8x1xf32>
    %44 = vector.broadcast %43 : vector<8x1xf32> to vector<8x256xf32>
    %45 = arith.mulf %42, %44 : vector<8x256xf32>
    %46 = arith.addf %31, %45 : vector<8x256xf32>
    %c0_17 = arith.constant 0 : index
    %c127 = arith.constant 127 : index
    %47 = vector.load %arg5[%c0_17, %c127] : memref<8x512xf32, #tpu.memory_space<vmem>>, vector<8x256xf32>
    %48 = vector.extract_strided_slice %27 {offsets = [0, 3], sizes = [8, 1], strides = [1, 1]} : vector<8x9xf32> to vector<8x1xf32>
    %49 = vector.broadcast %48 : vector<8x1xf32> to vector<8x256xf32>
    %50 = arith.mulf %47, %49 : vector<8x256xf32>
    %51 = arith.addf %36, %50 : vector<8x256xf32>
    %c0_18 = arith.constant 0 : index
    %c128_19 = arith.constant 128 : index
    %52 = vector.load %arg5[%c0_18, %c128_19] : memref<8x512xf32, #tpu.memory_space<vmem>>, vector<8x256xf32>
    %53 = vector.extract_strided_slice %27 {offsets = [0, 4], sizes = [8, 1], strides = [1, 1]} : vector<8x9xf32> to vector<8x1xf32>
    %54 = vector.broadcast %53 : vector<8x1xf32> to vector<8x256xf32>
    %55 = arith.mulf %52, %54 : vector<8x256xf32>
    %56 = arith.addf %41, %55 : vector<8x256xf32>
    %c0_20 = arith.constant 0 : index
    %c129 = arith.constant 129 : index
    %57 = vector.load %arg5[%c0_20, %c129] : memref<8x512xf32, #tpu.memory_space<vmem>>, vector<8x256xf32>
    %58 = vector.extract_strided_slice %27 {offsets = [0, 5], sizes = [8, 1], strides = [1, 1]} : vector<8x9xf32> to vector<8x1xf32>
    %59 = vector.broadcast %58 : vector<8x1xf32> to vector<8x256xf32>
    %60 = arith.mulf %57, %59 : vector<8x256xf32>
    %61 = arith.addf %46, %60 : vector<8x256xf32>
    %c0_21 = arith.constant 0 : index
    %c143 = arith.constant 143 : index
    %62 = vector.load %arg5[%c0_21, %c143] : memref<8x512xf32, #tpu.memory_space<vmem>>, vector<8x256xf32>
    %63 = vector.extract_strided_slice %27 {offsets = [0, 6], sizes = [8, 1], strides = [1, 1]} : vector<8x9xf32> to vector<8x1xf32>
    %64 = vector.broadcast %63 : vector<8x1xf32> to vector<8x256xf32>
    %65 = arith.mulf %62, %64 : vector<8x256xf32>
    %66 = arith.addf %51, %65 : vector<8x256xf32>
    %c0_22 = arith.constant 0 : index
    %c144 = arith.constant 144 : index
    %67 = vector.load %arg5[%c0_22, %c144] : memref<8x512xf32, #tpu.memory_space<vmem>>, vector<8x256xf32>
    %68 = vector.extract_strided_slice %27 {offsets = [0, 7], sizes = [8, 1], strides = [1, 1]} : vector<8x9xf32> to vector<8x1xf32>
    %69 = vector.broadcast %68 : vector<8x1xf32> to vector<8x256xf32>
    %70 = arith.mulf %67, %69 : vector<8x256xf32>
    %71 = arith.addf %56, %70 : vector<8x256xf32>
    %c0_23 = arith.constant 0 : index
    %c145 = arith.constant 145 : index
    %72 = vector.load %arg5[%c0_23, %c145] : memref<8x512xf32, #tpu.memory_space<vmem>>, vector<8x256xf32>
    %73 = vector.extract_strided_slice %27 {offsets = [0, 8], sizes = [8, 1], strides = [1, 1]} : vector<8x9xf32> to vector<8x1xf32>
    %74 = vector.broadcast %73 : vector<8x1xf32> to vector<8x256xf32>
    %75 = arith.mulf %72, %74 : vector<8x256xf32>
    %76 = arith.addf %61, %75 : vector<8x256xf32>
    %cst_24 = arith.constant 0.000000e+00 : f32
    %77 = vector.shape_cast %23 : vector<1x256xi1> to vector<1x256xi1>
    %78 = vector.broadcast %77 : vector<1x256xi1> to vector<8x256xi1>
    %79 = vector.broadcast %cst_24 : f32 to vector<8x256xf32>
    %80 = arith.select %78, %66, %79 : vector<8x256xi1>, vector<8x256xf32>
    %81 = arith.addf %71, %80 : vector<8x256xf32>
    %cst_25 = arith.constant 0.000000e+00 : f32
    %82 = vector.shape_cast %25 : vector<1x256xi1> to vector<1x256xi1>
    %83 = vector.broadcast %82 : vector<1x256xi1> to vector<8x256xi1>
    %84 = vector.broadcast %cst_25 : f32 to vector<8x256xf32>
    %85 = arith.select %83, %76, %84 : vector<8x256xi1>, vector<8x256xf32>
    %86 = arith.addf %81, %85 : vector<8x256xf32>
    %87 = vector.broadcast %28 : vector<8x1xf32> to vector<8x256xf32>
    %88 = arith.addf %86, %87 : vector<8x256xf32>
    %cst_26 = arith.constant 0.000000e+00 : f32
    %89 = vector.broadcast %cst_26 : f32 to vector<8x256xf32>
    %90 = arith.maximumf %88, %89 : vector<8x256xf32>
    %c0_27 = arith.constant 0 : index
    %c0_28 = arith.constant 0 : index
    %91 = vector.load %arg3[%c0_27, %c0_28] : memref<16x9xf32, #tpu.memory_space<vmem>>, vector<16x9xf32>
    %92 = vector.extract_strided_slice %91 {offsets = [0, 0], sizes = [16, 8], strides = [1, 1]} : vector<16x9xf32> to vector<16x8xf32>
    %93 = vector.extract_strided_slice %91 {offsets = [0, 8], sizes = [16, 1], strides = [1, 1]} : vector<16x9xf32> to vector<16x1xf32>
    %cst_29 = arith.constant 0.000000e+00 : f32
    %94 = vector.broadcast %cst_29 : f32 to vector<16x256xf32>
    %95 = vector.extract_strided_slice %92 {offsets = [0, 0], sizes = [16, 1], strides = [1, 1]} : vector<16x8xf32> to vector<16x1xf32>
    %96 = vector.extract_strided_slice %90 {offsets = [0, 0], sizes = [1, 256], strides = [1, 1]} : vector<8x256xf32> to vector<1x256xf32>
    %97 = vector.broadcast %95 : vector<16x1xf32> to vector<16x256xf32>
    %98 = vector.broadcast %96 : vector<1x256xf32> to vector<16x256xf32>
    %99 = arith.mulf %97, %98 : vector<16x256xf32>
    %100 = arith.addf %94, %99 : vector<16x256xf32>
    %101 = vector.extract_strided_slice %92 {offsets = [0, 1], sizes = [16, 1], strides = [1, 1]} : vector<16x8xf32> to vector<16x1xf32>
    %102 = vector.extract_strided_slice %90 {offsets = [1, 0], sizes = [1, 256], strides = [1, 1]} : vector<8x256xf32> to vector<1x256xf32>
    %103 = vector.broadcast %101 : vector<16x1xf32> to vector<16x256xf32>
    %104 = vector.broadcast %102 : vector<1x256xf32> to vector<16x256xf32>
    %105 = arith.mulf %103, %104 : vector<16x256xf32>
    %106 = arith.addf %100, %105 : vector<16x256xf32>
    %107 = vector.extract_strided_slice %92 {offsets = [0, 2], sizes = [16, 1], strides = [1, 1]} : vector<16x8xf32> to vector<16x1xf32>
    %108 = vector.extract_strided_slice %90 {offsets = [2, 0], sizes = [1, 256], strides = [1, 1]} : vector<8x256xf32> to vector<1x256xf32>
    %109 = vector.broadcast %107 : vector<16x1xf32> to vector<16x256xf32>
    %110 = vector.broadcast %108 : vector<1x256xf32> to vector<16x256xf32>
    %111 = arith.mulf %109, %110 : vector<16x256xf32>
    %112 = arith.addf %106, %111 : vector<16x256xf32>
    %113 = vector.extract_strided_slice %92 {offsets = [0, 3], sizes = [16, 1], strides = [1, 1]} : vector<16x8xf32> to vector<16x1xf32>
    %114 = vector.extract_strided_slice %90 {offsets = [3, 0], sizes = [1, 256], strides = [1, 1]} : vector<8x256xf32> to vector<1x256xf32>
    %115 = vector.broadcast %113 : vector<16x1xf32> to vector<16x256xf32>
    %116 = vector.broadcast %114 : vector<1x256xf32> to vector<16x256xf32>
    %117 = arith.mulf %115, %116 : vector<16x256xf32>
    %118 = arith.addf %112, %117 : vector<16x256xf32>
    %119 = vector.extract_strided_slice %92 {offsets = [0, 4], sizes = [16, 1], strides = [1, 1]} : vector<16x8xf32> to vector<16x1xf32>
    %120 = vector.extract_strided_slice %90 {offsets = [4, 0], sizes = [1, 256], strides = [1, 1]} : vector<8x256xf32> to vector<1x256xf32>
    %121 = vector.broadcast %119 : vector<16x1xf32> to vector<16x256xf32>
    %122 = vector.broadcast %120 : vector<1x256xf32> to vector<16x256xf32>
    %123 = arith.mulf %121, %122 : vector<16x256xf32>
    %124 = arith.addf %118, %123 : vector<16x256xf32>
    %125 = vector.extract_strided_slice %92 {offsets = [0, 5], sizes = [16, 1], strides = [1, 1]} : vector<16x8xf32> to vector<16x1xf32>
    %126 = vector.extract_strided_slice %90 {offsets = [5, 0], sizes = [1, 256], strides = [1, 1]} : vector<8x256xf32> to vector<1x256xf32>
    %127 = vector.broadcast %125 : vector<16x1xf32> to vector<16x256xf32>
    %128 = vector.broadcast %126 : vector<1x256xf32> to vector<16x256xf32>
    %129 = arith.mulf %127, %128 : vector<16x256xf32>
    %130 = arith.addf %124, %129 : vector<16x256xf32>
    %131 = vector.extract_strided_slice %92 {offsets = [0, 6], sizes = [16, 1], strides = [1, 1]} : vector<16x8xf32> to vector<16x1xf32>
    %132 = vector.extract_strided_slice %90 {offsets = [6, 0], sizes = [1, 256], strides = [1, 1]} : vector<8x256xf32> to vector<1x256xf32>
    %133 = vector.broadcast %131 : vector<16x1xf32> to vector<16x256xf32>
    %134 = vector.broadcast %132 : vector<1x256xf32> to vector<16x256xf32>
    %135 = arith.mulf %133, %134 : vector<16x256xf32>
    %136 = arith.addf %130, %135 : vector<16x256xf32>
    %137 = vector.extract_strided_slice %92 {offsets = [0, 7], sizes = [16, 1], strides = [1, 1]} : vector<16x8xf32> to vector<16x1xf32>
    %138 = vector.extract_strided_slice %90 {offsets = [7, 0], sizes = [1, 256], strides = [1, 1]} : vector<8x256xf32> to vector<1x256xf32>
    %139 = vector.broadcast %137 : vector<16x1xf32> to vector<16x256xf32>
    %140 = vector.broadcast %138 : vector<1x256xf32> to vector<16x256xf32>
    %141 = arith.mulf %139, %140 : vector<16x256xf32>
    %142 = arith.addf %136, %141 : vector<16x256xf32>
    %143 = vector.broadcast %93 : vector<16x1xf32> to vector<16x256xf32>
    %144 = arith.addf %142, %143 : vector<16x256xf32>
    %cst_30 = arith.constant 0.000000e+00 : f32
    %145 = vector.broadcast %cst_30 : f32 to vector<16x256xf32>
    %146 = arith.maximumf %144, %145 : vector<16x256xf32>
    %c0_31 = arith.constant 0 : index
    %c0_32 = arith.constant 0 : index
    %147 = vector.load %arg4[%c0_31, %c0_32] : memref<16x256xf32, #tpu.memory_space<vmem>>, vector<16x256xf32>
    tpu.vector_store %arg4[%c0_31, %c0_32], %146 {strides = array<i32>} : memref<16x256xf32, #tpu.memory_space<vmem>>, vector<16x256xf32>,
    return
  }
  func.func @transform_0(%arg0: i32) -> (i32, i32) {
    %c0_i32 = arith.constant 0 : i32
    %c0_i32_0 = arith.constant 0 : i32
    return %arg0, %c0_i32 : i32, i32
  }
  func.func @transform_1(%arg0: i32) -> (i32, i32) {
    %c0_i32 = arith.constant 0 : i32
    %c0_i32_0 = arith.constant 0 : i32
    %c0_i32_1 = arith.constant 0 : i32
    return %c0_i32, %c0_i32_0 : i32, i32
  }
  func.func @transform_2(%arg0: i32) -> (i32, i32) {
    %c0_i32 = arith.constant 0 : i32
    %c0_i32_0 = arith.constant 0 : i32
    %c0_i32_1 = arith.constant 0 : i32
    return %c0_i32, %c0_i32_0 : i32, i32
  }
  func.func @transform_3(%arg0: i32) -> (i32, i32) {
    %c0_i32 = arith.constant 0 : i32
    %c0_i32_0 = arith.constant 0 : i32
    return %arg0, %c0_i32 : i32, i32
  }
}

</mosaic_0001>

<llo_original>
// kernel: dsconv_pallas.1
$region0: #{dsconv_pallas.1}
  #allocation0 [shape = 'u32[]', space=smem, size = 0x4, offset = 0x4, fixed_abs, tag = 'smem constant byte address 0x4 - core index']
  #allocation1 [shape = 'u32[144,128]{1,0:T(1,128)}', space=vmem, size = 0x12000, scoped, tag = 'internal scratch']
  #allocation2 [shape = 'f32[8,512]{1,0:T(8,128)}', space=vmem, size = 0x4000, scoped, tag = 'scratch operand']
  %s0 = inlined_call_operand.vmem [shape: f32[8,256], index: 0, kind: input, shape index: {}]
  %s1 = inlined_call_operand.vmem [shape: f32[8,10], index: 1, kind: input, shape index: {}]
  %s2 = inlined_call_operand.vmem [shape: f32[16,9], index: 2, kind: input, shape index: {}]
  %s3 = inlined_call_operand.vmem [shape: f32[16,256], index: 3, kind: output, shape index: {}]
  %s4 = sld [smem:[#allocation0]]
  $region22: #{dsconv_pallas.1} parent=0
    _
  %s6 = ssub.s32 1, %s4
  %s7 = scalar_select 0, %s6, %s4
  // Predicated region
  $region2: #{dsconv_pallas.1} parent=0 // pred_check
    _
  $region3: #{dsconv_pallas.1} parent=0 // pred_check_branch
    %9 = sbr.rel (0) target = $region5
  $region4: #{dsconv_pallas.1} parent=0 // pred_region
    _
  $region5: #{dsconv_pallas.1} parent=0 // pred_fallthru
    _
  // Predicated region
  $region6: #{dsconv_pallas.1} parent=0 // pred_check
    _
  $region7: #{dsconv_pallas.1} parent=0 // pred_check_branch
    %11 = sbr.rel (0) target = $region9
  $region8: #{dsconv_pallas.1} parent=0 // pred_region
    _
  $region9: #{dsconv_pallas.1} parent=0 // pred_fallthru
    _
  // Predicated region
  $region10: #{dsconv_pallas.1} parent=0 // pred_check
    _
  $region11: #{dsconv_pallas.1} parent=0 // pred_check_branch
    %13 = sbr.rel (0) target = $region13
  $region12: #{dsconv_pallas.1} parent=0 // pred_region
    _
  $region13: #{dsconv_pallas.1} parent=0 // pred_fallthru
    _
  %vm14 = vcmask 1048440
  %15 = vst.msk [vmem:[#allocation2] sm:$0xff] %vm14, 0.0
  %vm16 = vcmask 138240
  %17 = vst.msk [vmem:[#allocation2 + $0x18] sm:$0xff] %vm16, 0.0
  %v18 = vld [vmem:[%s0] sm:$0xff]
  %v19 = vld [vmem:[%s0 + $0x8] sm:$0xff]
  %20 = vst [vmem:[#allocation2 + $0x8] sm:$0xff] %v18
  %21 = vst [vmem:[#allocation2 + $0x10] sm:$0xff] %v19
  %v22 = vlaneseq
  %v23 = vand.u32 %v22, 127
  %v24 = vadd.s32 %v23, 128
  %vm25 = vcmp.lt.s32.totalorder %v23, 0
  %v26 = vsub.s32 0, %v23
  %v27 = vsel %vm25, %v26, %v23
  %v28 = vshrl.u32 %v27, 4
  %v29 = vand.u32 %v27, 15
  %v30 = vsub.s32 0, %v29
  %v31 = vsel %vm25, %v30, %v29
  %vm32 = vcmp.lt.s32.totalorder %v24, 0
  %v33 = vsub.s32 0, %v24
  %v34 = vsel %vm32, %v33, %v24
  %v35 = vshrl.u32 %v34, 4
  %v36 = vand.u32 %v34, 15
  %v37 = vsub.s32 0, %v36
  %v38 = vsel %vm32, %v37, %v36
  %vm39 = vcmp.ne.s32.totalorder %v31, 0
  %vm40 = vcmp.ne.s32.totalorder %v38, 0
  %vm41 = vcmp.lt.s32.totalorder %v31, 0
  %vm42 = vcmp.lt.s32.totalorder %v38, 0
  %vm43 = vmand %vm41, %vm39
  %vm44 = vmand %vm42, %vm40
  %v45 = vadd.s32 %v31, 16
  %v46 = vadd.s32 %v38, 16
  %v47 = vsel %vm43, %v45, %v31
  %v48 = vsel %vm44, %v46, %v38
  %vm49 = vcmp.ge.s32.totalorder %v47, 1
  %vm50 = vcmp.ge.s32.totalorder %v48, 1
  %vm51 = vcmp.le.s32.totalorder %v47, 14
  %vm52 = vcmp.le.s32.totalorder %v48, 14
  %v53 = vld [vmem:[%s1] sm:$0xff]
  %v54 = vld [vmem:[#allocation2] sm:$0xff]
  %v55 = vld [vmem:[#allocation2 + $0x8] sm:$0xff]
  %v56 = vld [vmem:[#allocation2 + $0x10] sm:$0xff]
  %58 = vset.pattern.permute.xlu0 0
  %59 = vperm.xlu0 %58, %v53
  %v60 = vpop.permute.xlu0 %59
  %v62 = vmul.f32 %v54, %v60
  %v63 = vmul.f32 %v55, %v60
  %v64 = vmul.f32 %v56, %v60
  %v65 = vadd.f32 %v62, 0.0
  %v66 = vadd.f32 %v63, 0.0
  %v67 = vadd.f32 %v64, 0.0
  %68 = vset.pattern.permute.xlu0 1
  %69 = vperm.xlu0 %68, %v53
  %v70 = vpop.permute.xlu0 %69
  %v72 = vmul.f32 %v54, %v70
  %v73 = vmul.f32 %v55, %v70
  %v74 = vmul.f32 %v56, %v70
  %v75 = vadd.f32 %v72, 0.0
  %v76 = vadd.f32 %v73, 0.0
  %v77 = vadd.f32 %v74, 0.0
  %78 = vset.pattern.permute.xlu0 2
  %79 = vperm.xlu0 %78, %v53
  %v80 = vpop.permute.xlu0 %79
  %v82 = vmul.f32 %v54, %v80
  %v83 = vmul.f32 %v55, %v80
  %v84 = vmul.f32 %v56, %v80
  %v85 = vadd.f32 %v82, 0.0
  %v86 = vadd.f32 %v83, 0.0
  %v87 = vadd.f32 %v84, 0.0
  %88 = vset.pattern.permute.xlu0 3
  %89 = vperm.xlu0 %88, %v53
  %v90 = vpop.permute.xlu0 %89
  %v92 = vmul.f32 %v54, %v90
  %v93 = vmul.f32 %v55, %v90
  %v94 = vmul.f32 %v56, %v90
  %98 = vrot.lane.b32.xlu0 %v92, 112
  %v99 = vpop.permute.xlu0 %98
  %100 = vrot.lane.b32.xlu0 %v93, 112
  %v101 = vpop.permute.xlu0 %100
  %102 = vrot.lane.b32.xlu0 %v94, 112
  %v103 = vpop.permute.xlu0 %102
  %vm104 = vcmask 916480
  %v105 = vsel %vm104, %v99, %v101
  %v106 = vsel %vm104, %v101, %v103
  %v110 = vadd.f32 %v65, %v105
  %v111 = vadd.f32 %v66, %v106
  %v112 = vadd.f32 %v67, %v103
  %113 = vset.pattern.permute.xlu0 4
  %114 = vperm.xlu0 %113, %v53
  %v115 = vpop.permute.xlu0 %114
  %v117 = vmul.f32 %v55, %v115
  %v118 = vmul.f32 %v56, %v115
  %121 = vrot.lane.b32.xlu0 %v117, 112
  %v122 = vpop.permute.xlu0 %121
  %123 = vrot.lane.b32.xlu0 %v118, 112
  %v124 = vpop.permute.xlu0 %123
  %v125 = vsel %vm104, %v122, %v124
  %v129 = vadd.f32 %v75, %v122
  %v130 = vadd.f32 %v76, %v125
  %v131 = vadd.f32 %v77, %v124
  %v132 = vld [vmem:[#allocation2 + $0x8] sm:$0xff]
  %v133 = vld [vmem:[#allocation2 + $0x10] sm:$0xff]
  %v134 = vld [vmem:[#allocation2 + $0x18] sm:$0xff]
  %135 = vset.pattern.permute.xlu0 5
  %136 = vperm.xlu0 %135, %v53
  %v137 = vpop.permute.xlu0 %136
  %v139 = vmul.f32 %v132, %v137
  %v140 = vmul.f32 %v133, %v137
  %v141 = vmul.f32 %v134, %v137
  %145 = vrot.lane.b32.xlu0 %v139, 112
  %v146 = vpop.permute.xlu0 %145
  %147 = vrot.lane.b32.xlu0 %v140, 112
  %v148 = vpop.permute.xlu0 %147
  %149 = vrot.lane.b32.xlu0 %v141, 112
  %v150 = vpop.permute.xlu0 %149
  %v151 = vsel %vm104, %v146, %v148
  %v152 = vsel %vm104, %v148, %v150
  %v156 = vadd.f32 %v85, %v146
  %v157 = vadd.f32 %v86, %v151
  %v158 = vadd.f32 %v87, %v152
  %159 = vset.pattern.permute.xlu0 6
  %160 = vperm.xlu0 %159, %v53
  %v161 = vpop.permute.xlu0 %160
  %v163 = vmul.f32 %v132, %v161
  %v164 = vmul.f32 %v133, %v161
  %v165 = vmul.f32 %v134, %v161
  %169 = vrot.lane.b32.xlu0 %v163, 96
  %v170 = vpop.permute.xlu0 %169
  %171 = vrot.lane.b32.xlu0 %v164, 96
  %v172 = vpop.permute.xlu0 %171
  %173 = vrot.lane.b32.xlu0 %v165, 96
  %v174 = vpop.permute.xlu0 %173
  %vm175 = vcmask 785408
  %v176 = vsel %vm175, %v170, %v172
  %v177 = vsel %vm175, %v172, %v174
  %v181 = vadd.f32 %v110, %v170
  %v182 = vadd.f32 %v111, %v176
  %v183 = vadd.f32 %v112, %v177
  %184 = vset.pattern.permute.xlu0 7
  %185 = vperm.xlu0 %184, %v53
  %v186 = vpop.permute.xlu0 %185
  %v188 = vmul.f32 %v132, %v186
  %v189 = vmul.f32 %v133, %v186
  %v190 = vmul.f32 %v134, %v186
  %194 = vrot.lane.b32.xlu0 %v188, 96
  %v195 = vpop.permute.xlu0 %194
  %196 = vrot.lane.b32.xlu0 %v189, 96
  %v197 = vpop.permute.xlu0 %196
  %198 = vrot.lane.b32.xlu0 %v190, 96
  %v199 = vpop.permute.xlu0 %198
  %v200 = vsel %vm175, %v195, %v197
  %v201 = vsel %vm175, %v197, %v199
  %v205 = vadd.f32 %v129, %v195
  %v206 = vadd.f32 %v130, %v200
  %v207 = vadd.f32 %v131, %v201
  %208 = vset.pattern.permute.xlu0 8
  %209 = vperm.xlu0 %208, %v53
  %v210 = vpop.permute.xlu0 %209
  %v212 = vmul.f32 %v132, %v210
  %v213 = vmul.f32 %v133, %v210
  %v214 = vmul.f32 %v134, %v210
  %218 = vrot.lane.b32.xlu0 %v212, 96
  %v219 = vpop.permute.xlu0 %218
  %220 = vrot.lane.b32.xlu0 %v213, 96
  %v221 = vpop.permute.xlu0 %220
  %222 = vrot.lane.b32.xlu0 %v214, 96
  %v223 = vpop.permute.xlu0 %222
  %v224 = vsel %vm175, %v219, %v221
  %v225 = vsel %vm175, %v221, %v223
  %v229 = vadd.f32 %v156, %v219
  %v230 = vadd.f32 %v157, %v224
  %v231 = vadd.f32 %v158, %v225
  %v232 = vsel %vm49, 1, 0
  %v233 = vsel %vm50, 1, 0
  %vm234 = vcmp.eq.s32.totalorder %v232, 1
  %vm235 = vcmp.eq.s32.totalorder %v233, 1
  %239 = vrot.lane.b32.xlu0 %v181, 17
  %v240 = vpop.permute.xlu0 %239
  %241 = vrot.lane.b32.xlu0 %v182, 17
  %v242 = vpop.permute.xlu0 %241
  %243 = vrot.lane.b32.xlu0 %v183, 17
  %v244 = vpop.permute.xlu0 %243
  %v245 = vsel %vm16, %v240, %v242
  %v246 = vsel %vm16, %v242, %v244
  %v249 = vsel %vm234, %v245, 0.0
  %v250 = vsel %vm235, %v246, 0.0
  %253 = vrot.lane.b32.xlu0 %v249, 112
  %v254 = vpop.permute.xlu0 %253
  %255 = vrot.lane.b32.xlu0 %v250, 112
  %v256 = vpop.permute.xlu0 %255
  %v257 = vsel %vm104, %v254, %v256
  %v261 = vadd.f32 %v205, %v254
  %v262 = vadd.f32 %v206, %v257
  %v263 = vadd.f32 %v207, %v256
  %v264 = vsel %vm51, 1, 0
  %v265 = vsel %vm52, 1, 0
  %vm266 = vcmp.eq.s32.totalorder %v264, 1
  %vm267 = vcmp.eq.s32.totalorder %v265, 1
  %271 = vrot.lane.b32.xlu0 %v229, 15
  %v272 = vpop.permute.xlu0 %271
  %273 = vrot.lane.b32.xlu0 %v230, 15
  %v274 = vpop.permute.xlu0 %273
  %275 = vrot.lane.b32.xlu0 %v231, 15
  %v276 = vpop.permute.xlu0 %275
  %vm277 = vcmask 121856
  %v278 = vsel %vm277, %v272, %v274
  %v279 = vsel %vm277, %v274, %v276
  %v282 = vsel %vm266, %v278, 0.0
  %v283 = vsel %vm267, %v279, 0.0
  %286 = vrot.lane.b32.xlu0 %v282, 112
  %v287 = vpop.permute.xlu0 %286
  %288 = vrot.lane.b32.xlu0 %v283, 112
  %v289 = vpop.permute.xlu0 %288
  %v290 = vsel %vm104, %v287, %v289
  %v294 = vadd.f32 %v261, %v287
  %v295 = vadd.f32 %v262, %v290
  %v296 = vadd.f32 %v263, %v289
  %297 = vset.pattern.permute.xlu0 9
  %298 = vperm.xlu0 %297, %v53
  %v299 = vpop.permute.xlu0 %298
  %v301 = vadd.f32 %v294, %v299
  %v302 = vadd.f32 %v295, %v299
  %v303 = vadd.f32 %v296, %v299
  %v304 = vmax.f32 %v301, 0.0
  %v305 = vmax.f32 %v302, 0.0
  %v306 = vmax.f32 %v303, 0.0
  %v307 = vld [vmem:[%s2] sm:$0xff]
  %v308 = vld [vmem:[%s2 + $0x8] sm:$0xff]
  %310 = vset.pattern.permute.xlu0 0
  %311 = vperm.xlu0 %310, %v307
  %v312 = vpop.permute.xlu0 %311
  %315 = vset.pattern.permute.xlu0 0
  %316 = vperm.xlu0 %315, %v308
  %v317 = vpop.permute.xlu0 %316
  %v319 = vlaneseq
  %v320 = vshrl.u32 %v319, 7
  %v321 = vsub.s32 0, %v320
  %v322 = vrot.slane %v304, %v321
  %v323 = vlaneseq
  %v324 = vshrl.u32 %v323, 7
  %v325 = vsub.s32 0, %v324
  %v326 = vrot.slane %v305, %v325
  %v327 = vlaneseq
  %v328 = vshrl.u32 %v327, 7
  %v329 = vsub.s32 0, %v328
  %v330 = vrot.slane %v306, %v329
  %v331 = vmul.f32 %v312, %v322
  %v332 = vmul.f32 %v312, %v326
  %v333 = vmul.f32 %v312, %v330
  %v334 = vmul.f32 %v317, %v322
  %v335 = vmul.f32 %v317, %v326
  %v336 = vmul.f32 %v317, %v330
  %v337 = vadd.f32 %v331, 0.0
  %v338 = vadd.f32 %v332, 0.0
  %v339 = vadd.f32 %v333, 0.0
  %v340 = vadd.f32 %v334, 0.0
  %v341 = vadd.f32 %v335, 0.0
  %v342 = vadd.f32 %v336, 0.0
  %343 = vset.pattern.permute.xlu0 1
  %344 = vperm.xlu0 %343, %v307
  %v345 = vpop.permute.xlu0 %344
  %347 = vset.pattern.permute.xlu0 1
  %348 = vperm.xlu0 %347, %v308
  %v349 = vpop.permute.xlu0 %348
  %v351 = vlaneseq
  %v352 = vshrl.u32 %v351, 7
  %v353 = vsub.s32 1, %v352
  %v354 = vrot.slane %v304, %v353
  %v355 = vlaneseq
  %v356 = vshrl.u32 %v355, 7
  %v357 = vsub.s32 1, %v356
  %v358 = vrot.slane %v305, %v357
  %v359 = vlaneseq
  %v360 = vshrl.u32 %v359, 7
  %v361 = vsub.s32 1, %v360
  %v362 = vrot.slane %v306, %v361
  %v363 = vmul.f32 %v345, %v354
  %v364 = vmul.f32 %v345, %v358
  %v365 = vmul.f32 %v345, %v362
  %v366 = vmul.f32 %v349, %v354
  %v367 = vmul.f32 %v349, %v358
  %v368 = vmul.f32 %v349, %v362
  %v369 = vadd.f32 %v337, %v363
  %v370 = vadd.f32 %v338, %v364
  %v371 = vadd.f32 %v339, %v365
  %v372 = vadd.f32 %v340, %v366
  %v373 = vadd.f32 %v341, %v367
  %v374 = vadd.f32 %v342, %v368
  %375 = vset.pattern.permute.xlu0 2
  %376 = vperm.xlu0 %375, %v307
  %v377 = vpop.permute.xlu0 %376
  %379 = vset.pattern.permute.xlu0 2
  %380 = vperm.xlu0 %379, %v308
  %v381 = vpop.permute.xlu0 %380
  %v383 = vlaneseq
  %v384 = vshrl.u32 %v383, 7
  %v385 = vsub.s32 2, %v384
  %v386 = vrot.slane %v304, %v385
  %v387 = vlaneseq
  %v388 = vshrl.u32 %v387, 7
  %v389 = vsub.s32 2, %v388
  %v390 = vrot.slane %v305, %v389
  %v391 = vlaneseq
  %v392 = vshrl.u32 %v391, 7
  %v393 = vsub.s32 2, %v392
  %v394 = vrot.slane %v306, %v393
  %v395 = vmul.f32 %v377, %v386
  %v396 = vmul.f32 %v377, %v390
  %v397 = vmul.f32 %v377, %v394
  %v398 = vmul.f32 %v381, %v386
  %v399 = vmul.f32 %v381, %v390
  %v400 = vmul.f32 %v381, %v394
  %v401 = vadd.f32 %v369, %v395
  %v402 = vadd.f32 %v370, %v396
  %v403 = vadd.f32 %v371, %v397
  %v404 = vadd.f32 %v372, %v398
  %v405 = vadd.f32 %v373, %v399
  %v406 = vadd.f32 %v374, %v400
  %407 = vset.pattern.permute.xlu0 3
  %408 = vperm.xlu0 %407, %v307
  %v409 = vpop.permute.xlu0 %408
  %411 = vset.pattern.permute.xlu0 3
  %412 = vperm.xlu0 %411, %v308
  %v413 = vpop.permute.xlu0 %412
  %v415 = vlaneseq
  %v416 = vshrl.u32 %v415, 7
  %v417 = vsub.s32 3, %v416
  %v418 = vrot.slane %v304, %v417
  %v419 = vlaneseq
  %v420 = vshrl.u32 %v419, 7
  %v421 = vsub.s32 3, %v420
  %v422 = vrot.slane %v305, %v421
  %v423 = vlaneseq
  %v424 = vshrl.u32 %v423, 7
  %v425 = vsub.s32 3, %v424
  %v426 = vrot.slane %v306, %v425
  %v427 = vmul.f32 %v409, %v418
  %v428 = vmul.f32 %v409, %v422
  %v429 = vmul.f32 %v409, %v426
  %v430 = vmul.f32 %v413, %v418
  %v431 = vmul.f32 %v413, %v422
  %v432 = vmul.f32 %v413, %v426
  %v433 = vadd.f32 %v401, %v427
  %v434 = vadd.f32 %v402, %v428
  %v435 = vadd.f32 %v403, %v429
  %v436 = vadd.f32 %v404, %v430
  %v437 = vadd.f32 %v405, %v431
  %v438 = vadd.f32 %v406, %v432
  %439 = vset.pattern.permute.xlu0 4
  %440 = vperm.xlu0 %439, %v307
  %v441 = vpop.permute.xlu0 %440
  %443 = vset.pattern.permute.xlu0 4
  %444 = vperm.xlu0 %443, %v308
  %v445 = vpop.permute.xlu0 %444
  %v447 = vlaneseq
  %v448 = vshrl.u32 %v447, 7
  %v449 = vsub.s32 4, %v448
  %v450 = vrot.slane %v304, %v449
  %v451 = vlaneseq
  %v452 = vshrl.u32 %v451, 7
  %v453 = vsub.s32 4, %v452
  %v454 = vrot.slane %v305, %v453
  %v455 = vlaneseq
  %v456 = vshrl.u32 %v455, 7
  %v457 = vsub.s32 4, %v456
  %v458 = vrot.slane %v306, %v457
  %v459 = vmul.f32 %v441, %v450
  %v460 = vmul.f32 %v441, %v454
  %v461 = vmul.f32 %v441, %v458
  %v462 = vmul.f32 %v445, %v450
  %v463 = vmul.f32 %v445, %v454
  %v464 = vmul.f32 %v445, %v458
  %v465 = vadd.f32 %v433, %v459
  %v466 = vadd.f32 %v434, %v460
  %v467 = vadd.f32 %v435, %v461
  %v468 = vadd.f32 %v436, %v462
  %v469 = vadd.f32 %v437, %v463
  %v470 = vadd.f32 %v438, %v464
  %471 = vset.pattern.permute.xlu0 5
  %472 = vperm.xlu0 %471, %v307
  %v473 = vpop.permute.xlu0 %472
  %475 = vset.pattern.permute.xlu0 5
  %476 = vperm.xlu0 %475, %v308
  %v477 = vpop.permute.xlu0 %476
  %v479 = vlaneseq
  %v480 = vshrl.u32 %v479, 7
  %v481 = vsub.s32 5, %v480
  %v482 = vrot.slane %v304, %v481
  %v483 = vlaneseq
  %v484 = vshrl.u32 %v483, 7
  %v485 = vsub.s32 5, %v484
  %v486 = vrot.slane %v305, %v485
  %v487 = vlaneseq
  %v488 = vshrl.u32 %v487, 7
  %v489 = vsub.s32 5, %v488
  %v490 = vrot.slane %v306, %v489
  %v491 = vmul.f32 %v473, %v482
  %v492 = vmul.f32 %v473, %v486
  %v493 = vmul.f32 %v473, %v490
  %v494 = vmul.f32 %v477, %v482
  %v495 = vmul.f32 %v477, %v486
  %v496 = vmul.f32 %v477, %v490
  %v497 = vadd.f32 %v465, %v491
  %v498 = vadd.f32 %v466, %v492
  %v499 = vadd.f32 %v467, %v493
  %v500 = vadd.f32 %v468, %v494
  %v501 = vadd.f32 %v469, %v495
  %v502 = vadd.f32 %v470, %v496
  %503 = vset.pattern.permute.xlu0 6
  %504 = vperm.xlu0 %503, %v307
  %v505 = vpop.permute.xlu0 %504
  %507 = vset.pattern.permute.xlu0 6
  %508 = vperm.xlu0 %507, %v308
  %v509 = vpop.permute.xlu0 %508
  %v511 = vlaneseq
  %v512 = vshrl.u32 %v511, 7
  %v513 = vsub.s32 6, %v512
  %v514 = vrot.slane %v304, %v513
  %v515 = vlaneseq
  %v516 = vshrl.u32 %v515, 7
  %v517 = vsub.s32 6, %v516
  %v518 = vrot.slane %v305, %v517
  %v519 = vlaneseq
  %v520 = vshrl.u32 %v519, 7
  %v521 = vsub.s32 6, %v520
  %v522 = vrot.slane %v306, %v521
  %v523 = vmul.f32 %v505, %v514
  %v524 = vmul.f32 %v505, %v518
  %v525 = vmul.f32 %v505, %v522
  %v526 = vmul.f32 %v509, %v514
  %v527 = vmul.f32 %v509, %v518
  %v528 = vmul.f32 %v509, %v522
  %v529 = vadd.f32 %v497, %v523
  %v530 = vadd.f32 %v498, %v524
  %v531 = vadd.f32 %v499, %v525
  %v532 = vadd.f32 %v500, %v526
  %v533 = vadd.f32 %v501, %v527
  %v534 = vadd.f32 %v502, %v528
  %535 = vset.pattern.permute.xlu0 7
  %536 = vperm.xlu0 %535, %v307
  %v537 = vpop.permute.xlu0 %536
  %539 = vset.pattern.permute.xlu0 7
  %540 = vperm.xlu0 %539, %v308
  %v541 = vpop.permute.xlu0 %540
  %v543 = vlaneseq
  %v544 = vshrl.u32 %v543, 7
  %v545 = vsub.s32 7, %v544
  %v546 = vrot.slane %v304, %v545
  %v547 = vlaneseq
  %v548 = vshrl.u32 %v547, 7
  %v549 = vsub.s32 7, %v548
  %v550 = vrot.slane %v305, %v549
  %v551 = vlaneseq
  %v552 = vshrl.u32 %v551, 7
  %v553 = vsub.s32 7, %v552
  %v554 = vrot.slane %v306, %v553
  %v555 = vmul.f32 %v537, %v546
  %v556 = vmul.f32 %v537, %v550
  %v557 = vmul.f32 %v537, %v554
  %v558 = vmul.f32 %v541, %v546
  %v559 = vmul.f32 %v541, %v550
  %v560 = vmul.f32 %v541, %v554
  %v561 = vadd.f32 %v529, %v555
  %v562 = vadd.f32 %v530, %v556
  %v563 = vadd.f32 %v531, %v557
  %v564 = vadd.f32 %v532, %v558
  %v565 = vadd.f32 %v533, %v559
  %v566 = vadd.f32 %v534, %v560
  %567 = vset.pattern.permute.xlu0 8
  %568 = vperm.xlu0 %567, %v307
  %v569 = vpop.permute.xlu0 %568
  %571 = vset.pattern.permute.xlu0 8
  %572 = vperm.xlu0 %571, %v308
  %v573 = vpop.permute.xlu0 %572
  %v575 = vadd.f32 %v561, %v569
  %v576 = vadd.f32 %v562, %v569
  %v577 = vadd.f32 %v563, %v569
  %v578 = vadd.f32 %v564, %v573
  %v579 = vadd.f32 %v565, %v573
  %v580 = vadd.f32 %v566, %v573
  %v581 = vmax.f32 %v575, 0.0
  %v582 = vmax.f32 %v576, 0.0
  %v583 = vmax.f32 %v577, 0.0
  %v584 = vmax.f32 %v578, 0.0
  %v585 = vmax.f32 %v579, 0.0
  %v586 = vmax.f32 %v580, 0.0
  %593 = vrot.lane.b32.xlu0 %v581, 16
  %v594 = vpop.permute.xlu0 %593
  %595 = vrot.lane.b32.xlu0 %v582, 16
  %v596 = vpop.permute.xlu0 %595
  %597 = vrot.lane.b32.xlu0 %v583, 16
  %v598 = vpop.permute.xlu0 %597
  %599 = vrot.lane.b32.xlu0 %v584, 16
  %v600 = vpop.permute.xlu0 %599
  %601 = vrot.lane.b32.xlu0 %v585, 16
  %v602 = vpop.permute.xlu0 %601
  %603 = vrot.lane.b32.xlu0 %v586, 16
  %v604 = vpop.permute.xlu0 %603
  %vm605 = vcmask 130048
  %v606 = vsel %vm605, %v594, %v596
  %v607 = vsel %vm605, %v596, %v598
  %v608 = vsel %vm605, %v600, %v602
  %v609 = vsel %vm605, %v602, %v604
  %614 = vst [vmem:[%s3] sm:$0xff] %v606
  %615 = vst [vmem:[%s3 + $0x8] sm:$0xff] %v607
  %616 = vst [vmem:[%s3 + $0x10] sm:$0xff] %v608
  %617 = vst [vmem:[%s3 + $0x18] sm:$0xff] %v609
  // Predicated region
  $region14: #{dsconv_pallas.1} parent=0 // pred_check
    _
  $region15: #{dsconv_pallas.1} parent=0 // pred_check_branch
    %619 = sbr.rel (0) target = $region17
  $region16: #{dsconv_pallas.1} parent=0 // pred_region
    _
  $region17: #{dsconv_pallas.1} parent=0 // pred_fallthru
    _
  // Predicated region
  $region18: #{dsconv_pallas.1} parent=0 // pred_check
    _
  $region19: #{dsconv_pallas.1} parent=0 // pred_check_branch
    %621 = sbr.rel (0) target = $region21
  $region20: #{dsconv_pallas.1} parent=0 // pred_region
    _
  $region21: #{dsconv_pallas.1} parent=0 // pred_fallthru
    _

</llo_original>
